<compile_context>
chip_gen: v7x
topology: tpu7x:2x2x1
jax: 0.10.0
libtpu: 0.0.40
codegen_flags: <defaults>
</compile_context>

<pallas_src>
import jax
import jax.numpy as jnp
from jax import lax
from jax.experimental import pallas as pl
from jax.experimental.pallas import tpu as pltpu


def _round_up(x, m):
    return (x + m - 1) // m * m


# --------------------------------------------------------------------------
# BatchNorm batch statistics: one lane-dense pass directly over NCHW input.
# --------------------------------------------------------------------------
def _make_bn_stats_kernel(M):
    inv_m = 1.0 / M

    def kernel(x_ref, s1_ref, s2_ref):
        xf = x_ref[0].astype(jnp.float32)            # (C, M): C sublanes, M lanes
        s1 = jnp.sum(xf, axis=1, keepdims=True)      # (C, 1) per-image channel sums
        d = xf - s1 * inv_m                          # centered within this image
        s1_ref[0] = s1
        s2_ref[0] = jnp.sum(d * d, axis=1, keepdims=True)

    return kernel


def bn_batch_stats(x_nchw):
    """Per-channel biased mean/var (PyTorch training-mode BN), single HBM pass.

    The kernel reads the NCHW layout directly (H*W on the 128-lane axis, so the
    reduction is lane-dense even for small C) and emits per-image sums plus
    per-image *centered* second moments; the exact pooled-variance combine on the
    tiny (N, C) arrays avoids the E[x^2]-E[x]^2 cancellation.
    """
    N, C, H, W = x_nchw.shape
    M = H * W
    x3 = x_nchw.reshape(N, C, M)                     # free (contiguous) reshape
    # TODO(synk): for very large C*H*W add an M-chunk grid axis and extend the
    # pooled combine to (image, chunk) groups so each block stays a few MiB.
    s1, s2 = pl.pallas_call(
        _make_bn_stats_kernel(M),
        grid=(N,),
        in_specs=[pl.BlockSpec((1, C, M), lambda n: (n, 0, 0))],
        out_specs=(pl.BlockSpec((1, C, 1), lambda n: (n, 0, 0)),
                   pl.BlockSpec((1, C, 1), lambda n: (n, 0, 0))),
        out_shape=(jax.ShapeDtypeStruct((N, C, 1), jnp.float32),
                   jax.ShapeDtypeStruct((N, C, 1), jnp.float32)),
        compiler_params=pltpu.CompilerParams(dimension_semantics=("parallel",)),
    )(x3)
    s1 = s1[..., 0]                                  # (N, C)
    s2 = s2[..., 0]                                  # (N, C)
    cnt = N * M
    mean = jnp.sum(s1, axis=0) / cnt
    mu_n = s1 / M
    var = (jnp.sum(s2, axis=0)
           + M * jnp.sum((mu_n - mean[None, :]) ** 2, axis=0)) / cnt
    return mean, jnp.maximum(var, 0.0)


# --------------------------------------------------------------------------
# Fused BN + ReLU + Conv(Kx1) + Conv(1xK) kernel.
# --------------------------------------------------------------------------
def _make_facconv_kernel(bb, H, Wc, Hp, Wp, hl, wl, H1, K, stride, Cin, Cout):
    nrows = H1 * Wp   # rows of the flattened (H-major, W-minor) matmul operands

    def kernel(x_ref, scale_ref, shift_ref, w1_ref, w2_ref, o_ref, xp_scr):
        zdt = xp_scr.dtype

        # ---- Zero ONLY the pad border (every step: scratch is per-core) --------
        # Interior is fully overwritten per image below.  Bottom strip runs to Hp
        # and the right strip to Wp (covers stride>1 / alignment slack).
        if hl > 0:
            xp_scr[:hl] = jnp.zeros((hl, Wp, Cin), zdt)
        if Hp - (hl + H) > 0:
            xp_scr[hl + H:] = jnp.zeros((Hp - hl - H, Wp, Cin), zdt)
        if wl > 0:
            xp_scr[:, :wl, :] = jnp.zeros((Hp, wl, Cin), zdt)
        if Wp - (wl + Wc) > 0:
            xp_scr[:, wl + Wc:, :] = jnp.zeros((Hp, Wp - wl - Wc, Cin), zdt)

        scale = scale_ref[...]                       # (1, 1, Cin) f32
        shift = shift_ref[...]

        for b in range(bb):                          # images folded into one step
            # ---- BN scale/shift + ReLU in f32, single cast into bf16 scratch ---
            # wl % 8 == 0 -> the interior write is sublane-aligned (no vst.msk).
            xf = x_ref[b].astype(jnp.float32)        # (H, Wc, Cin)
            xp_scr[hl:hl + H, wl:wl + Wc, :] = jnp.maximum(
                xf * scale + shift, 0.0).astype(zdt)

            # ---- Conv (K x 1) over H: K accumulating MXU matmuls ----------------
            # Tap k is rows [k, k+H1) of the padded image (8-aligned flat windows
            # since Wp % 8 == 0); H-stride handled by a strided *ref* read.
            y1 = None
            for k in range(K):
                if stride == 1:
                    slab = xp_scr[k:k + H1]
                else:
                    slab = xp_scr[pl.ds(k, H1, stride=stride)]
                t = jnp.dot(slab.reshape(nrows, Cin), w1_ref[k],
                            preferred_element_type=jnp.float32)
                y1 = t if y1 is None else y1 + t
            # Zero columns of xp_scr ([wl-pad, wl) and [wl+Wc, wl+Wc+pad)) carry
            # through y1 and act as the (1xK) conv's W zero-padding.

            # ---- Conv (1 x K) over W: K accumulating matmuls --------------------
            # The W shift commutes with the channel contraction, so cast y1 to
            # bf16 ONCE and roll the f32 matmul results (XLU slot) instead.
            y1b = y1.astype(jnp.bfloat16)            # (nrows, Cin)
            y2 = None
            for k in range(K):
                t = jnp.dot(y1b, w2_ref[k], preferred_element_type=jnp.float32)
                if k:
                    t = pltpu.roll(t, shift=nrows - k, axis=0)
                y2 = t if y2 is None else y2 + t
            # Rolled-around rows only land in output columns outside the kept
            # window, which the wrapper strips.

            # Full-block aligned bf16 store (no channel padding, no masked slice).
            o_ref[b] = y2.reshape(H1, Wp, Cout).astype(o_ref.dtype)

    return kernel


def fac_conv_forward(x_nchw, params, kernel_length, stride, padding):
    gamma, beta, w1_t, w2_t = params['gamma'], params['beta'], params['w1'], params['w2']
    K, s, p = kernel_length, stride, padding
    N, Cin, H, W = x_nchw.shape
    Cout = w2_t.shape[0]
    eps = 1e-5

    # BatchNorm2d (training mode) batch statistics: one Pallas pass over NCHW x.
    mean, var = bn_batch_stats(x_nchw.astype(jnp.float32))
    scale = (gamma / jnp.sqrt(var + eps)).astype(jnp.float32)
    shift = (beta - mean * scale).astype(jnp.float32)

    # The (Kx1) conv has kernel width 1 and ZERO W-padding, so its W-stride is
    # pure column subsampling of the unpadded input and commutes with the
    # pointwise BN/ReLU -> fuse it here with the NHWC transpose and bf16 cast
    # (one HBM read of x, one half-size write).
    xs = jnp.transpose(x_nchw[:, :, :, ::s], (0, 2, 3, 1)).astype(jnp.bfloat16)
    Wc = xs.shape[2]

    # ---- Geometry --------------------------------------------------------------
    H1 = (H + 2 * p - K) // s + 1         # height after Conv(Kx1)  (== final height)
    W2 = Wc + 2 * p - K + 1               # width  after Conv(1xK)  (== final width)
    hl = p                                # top zero rows in the scratch
    wl = 0 if p == 0 else _round_up(p, 8) # left zero cols: 8-aligned interior write
    Hp = max(H + 2 * p, (H1 - 1) * s + K)
    Wp = _round_up(wl + Wc + p, 8)        # scratch width (multiple of 8 sublanes)
    nrows = H1 * Wp

    # ---- Per-tap weights (bf16 for the MXU) ------------------------------------
    #   w1_k[k, ci, cm] = w1_t[cm, ci, k, 0]     Conv2d(Cin, Cin, (K,1))
    #   w2_k[k, cm, co] = w2_t[co, cm, 0, k]     Conv2d(Cin, Cout,(1,K))
    w1_k = jnp.transpose(w1_t[:, :, :, 0], (2, 1, 0)).astype(jnp.bfloat16)
    w2_k = jnp.transpose(w2_t[:, :, 0, :], (2, 1, 0)).astype(jnp.bfloat16)

    # ---- Images per grid step (amortize ~0.35us/step when the problem is tiny) -
    per_img = H * Wc * Cin * 2 + H1 * Wp * Cout * 2
    bb = 1
    for cand in (8, 4, 2):
        if N % cand == 0 and cand * per_img <= (4 << 20):
            bb = cand
            break

    # ---- Explicit VMEM budget (v7x: 64 MiB physical per TensorCore) ------------
    vmem_est = (2 * bb * per_img                       # double-buffered in/out blocks
                + Hp * Wp * Cin * 2                    # bf16 padded-image scratch
                + 2 * (w1_k.size + w2_k.size) * 2 + 4 * Cin * 4
                + 2 * nrows * (Cin + Cout) * 4)        # y1/y2 f32 temporaries
    vmem_limit = int(min(max(2 * vmem_est, 32 << 20), 64 << 20))

    cost = pl.CostEstimate(
        flops=2 * N * nrows * K * Cin * (Cin + Cout),
        transcendentals=0,
        bytes_accessed=(xs.size * 2 + (w1_k.size + w2_k.size) * 2 + 2 * Cin * 4
                        + N * H1 * Wp * Cout * 2),
    )

    kernel = _make_facconv_kernel(bb, H, Wc, Hp, Wp, hl, wl, H1, K, s, Cin, Cout)
    # TODO(synk): for large H/W/Cin add an H-tile grid axis with a (K-1)+stride
    # halo (manual DMA) marked 'parallel' as well, so v7x's two TensorCores stay
    # busy at N=1 and per-step blocks fit its 64 MiB VMEM.
    out = pl.pallas_call(
        kernel,
        grid=(N // bb,),
        in_specs=[
            pl.BlockSpec((bb, H, Wc, Cin), lambda n: (n, 0, 0, 0)),
            pl.BlockSpec((1, 1, Cin), lambda n: (0, 0, 0)),
            pl.BlockSpec((1, 1, Cin), lambda n: (0, 0, 0)),
            pl.BlockSpec((K, Cin, Cin), lambda n: (0, 0, 0)),
            pl.BlockSpec((K, Cin, Cout), lambda n: (0, 0, 0)),
        ],
        out_specs=pl.BlockSpec((bb, H1, Wp, Cout), lambda n: (n, 0, 0, 0)),
        out_shape=jax.ShapeDtypeStruct((N, H1, Wp, Cout), jnp.bfloat16),
        scratch_shapes=[pltpu.VMEM((Hp, Wp, Cin), jnp.bfloat16)],
        compiler_params=pltpu.CompilerParams(
            dimension_semantics=("parallel",), vmem_limit_bytes=vmem_limit),
        cost_estimate=cost,
    )(xs, scale.reshape(1, 1, Cin), shift.reshape(1, 1, Cin), w1_k, w2_k)

    # Strip the W window and go back to NCHW f32 in one fused slice+transpose+cast.
    w0 = wl - p
    return jnp.transpose(out[:, :, w0:w0 + W2, :], (0, 3, 1, 2)).astype(jnp.float32)


# ---------------- pure-JAX reference (for self-check) ----------------
def fac_conv_reference(x, params, K, s, p):
    gamma, beta, w1_t, w2_t = params['gamma'], params['beta'], params['w1'], params['w2']
    eps = 1e-5
    mean = jnp.mean(x, axis=(0, 2, 3))
    var = jnp.mean((x - mean[None, :, None, None]) ** 2, axis=(0, 2, 3))
    xn = (x - mean[None, :, None, None]) / jnp.sqrt(var + eps)[None, :, None, None]
    xn = xn * gamma[None, :, None, None] + beta[None, :, None, None]
    xa = jnp.maximum(xn, 0.0)
    dn = ('NCHW', 'OIHW', 'NCHW')
    y1 = lax.conv_general_dilated(xa, w1_t, (s, s), ((p, p), (0, 0)),
                                  dimension_numbers=dn, precision=lax.Precision.HIGHEST)
    y2 = lax.conv_general_dilated(y1, w2_t, (1, 1), ((0, 0), (p, p)),
                                  dimension_numbers=dn, precision=lax.Precision.HIGHEST)
    return y2


if __name__ == "__main__":
    key = jax.random.PRNGKey(0)
    N, Cin, H, W = 2, 4, 16, 16
    Cout, K, stride, padding = 8, 3, 1, 1

    k1, k2, k3, k4, k5 = jax.random.split(key, 5)
    x = jax.random.normal(k1, (N, Cin, H, W), jnp.float32)
    params = {
        'gamma': 1.0 + 0.1 * jax.random.normal(k2, (Cin,), jnp.float32),
        'beta': 0.1 * jax.random.normal(k3, (Cin,), jnp.float32),
        'w1': 0.2 * jax.random.normal(k4, (Cin, Cin, K, 1), jnp.float32),   # Conv2d(C_in,C_in,(K,1))
        'w2': 0.2 * jax.random.normal(k5, (Cout, Cin, 1, K), jnp.float32),  # Conv2d(C_in,C_out,(1,K))
    }

    out = fac_conv_forward(x, params, K, stride, padding)
    out = jax.block_until_ready(out)

    ref = fac_conv_reference(x, params, K, stride, padding)
    assert out.shape == ref.shape, (out.shape, ref.shape)
    # bf16 matmul operands + bf16 kernel output -> slightly wider tolerance than f32.
    if not jnp.allclose(out, ref, rtol=2e-2, atol=2e-2):
        raise AssertionError(
            f"mismatch vs reference, max abs err = {jnp.max(jnp.abs(out - ref))}")
    print("KERNEL_OK")
</pallas_src>

<mosaic_0001>
module attributes {stable_mosaic.version = 11 : i64} {
  func.func @kernel(%arg0: i32, %arg1: memref<1x4x256xf32, #tpu.memory_space<vmem>>, %arg2: memref<1x4x1xf32, #tpu.memory_space<vmem>>, %arg3: memref<1x4x1xf32, #tpu.memory_space<vmem>>) attributes {dimension_semantics = [#tpu.dimension_semantics<parallel>], iteration_bounds = array<i64: 2>, scalar_prefetch = 0 : i64, scratch_operands = 0 : i64, tpu.core_type = #tpu.core_type<tc>, window_params = [{transform_indices = @transform_0, window_bounds = array<i64: 1, 4, 256>}, {transform_indices = @transform_1, window_bounds = array<i64: 1, 4, 1>}, {transform_indices = @transform_2, window_bounds = array<i64: 1, 4, 1>}]} {
    %c0 = arith.constant 0 : index
    %c0_0 = arith.constant 0 : index
    %c0_1 = arith.constant 0 : index
    %0 = vector.load %arg1[%c0, %c0_0, %c0_1] : memref<1x4x256xf32, #tpu.memory_space<vmem>>, vector<1x4x256xf32>
    %1 = vector.shape_cast %0 : vector<1x4x256xf32> to vector<4x256xf32>
    %cst = arith.constant dense<0.000000e+00> : vector<4xf32>
    %2 = vector.multi_reduction <add>, %1, %cst [1] : vector<4x256xf32> to vector<4xf32>
    %3 = vector.shape_cast %2 : vector<4xf32> to vector<4x1xf32>
    %cst_2 = arith.constant 3.906250e-03 : f32
    %4 = vector.broadcast %cst_2 : f32 to vector<4x1xf32>
    %5 = arith.mulf %3, %4 : vector<4x1xf32>
    %6 = vector.broadcast %5 : vector<4x1xf32> to vector<4x256xf32>
    %7 = arith.subf %1, %6 : vector<4x256xf32>
    %c0_3 = arith.constant 0 : index
    %c0_4 = arith.constant 0 : index
    %c0_5 = arith.constant 0 : index
    %8 = vector.load %arg2[%c0_3, %c0_4, %c0_5] : memref<1x4x1xf32, #tpu.memory_space<vmem>>, vector<1x4x1xf32>
    %9 = vector.shape_cast %8 : vector<1x4x1xf32> to vector<4x1xf32>
    %10 = vector.shape_cast %3 : vector<4x1xf32> to vector<1x4x1xf32>
    tpu.vector_store %arg2[%c0_3, %c0_4, %c0_5], %10 {strides = array<i32>} : memref<1x4x1xf32, #tpu.memory_space<vmem>>, vector<1x4x1xf32>,
    %11 = arith.mulf %7, %7 : vector<4x256xf32>
    %cst_6 = arith.constant dense<0.000000e+00> : vector<4xf32>
    %12 = vector.multi_reduction <add>, %11, %cst_6 [1] : vector<4x256xf32> to vector<4xf32>
    %13 = vector.shape_cast %12 : vector<4xf32> to vector<4x1xf32>
    %c0_7 = arith.constant 0 : index
    %c0_8 = arith.constant 0 : index
    %c0_9 = arith.constant 0 : index
    %14 = vector.load %arg3[%c0_7, %c0_8, %c0_9] : memref<1x4x1xf32, #tpu.memory_space<vmem>>, vector<1x4x1xf32>
    %15 = vector.shape_cast %14 : vector<1x4x1xf32> to vector<4x1xf32>
    %16 = vector.shape_cast %13 : vector<4x1xf32> to vector<1x4x1xf32>
    tpu.vector_store %arg3[%c0_7, %c0_8, %c0_9], %16 {strides = array<i32>} : memref<1x4x1xf32, #tpu.memory_space<vmem>>, vector<1x4x1xf32>,
    return
  }
  func.func @transform_0(%arg0: i32) -> (i32, i32, i32) {
    %c0_i32 = arith.constant 0 : i32
    %c0_i32_0 = arith.constant 0 : i32
    %c0_i32_1 = arith.constant 0 : i32
    return %arg0, %c0_i32, %c0_i32_0 : i32, i32, i32
  }
  func.func @transform_1(%arg0: i32) -> (i32, i32, i32) {
    %c0_i32 = arith.constant 0 : i32
    %c0_i32_0 = arith.constant 0 : i32
    %c0_i32_1 = arith.constant 0 : i32
    return %arg0, %c0_i32, %c0_i32_0 : i32, i32, i32
  }
  func.func @transform_2(%arg0: i32) -> (i32, i32, i32) {
    %c0_i32 = arith.constant 0 : i32
    %c0_i32_0 = arith.constant 0 : i32
    %c0_i32_1 = arith.constant 0 : i32
    return %arg0, %c0_i32, %c0_i32_0 : i32, i32, i32
  }
}

</mosaic_0001>

<llo_original>
// kernel: tpu_custom_call.1
$region0: #{tpu_custom_call.1}
  #allocation0 [shape = 'u32[]', space=smem, size = 0x4, offset = 0x4, fixed_abs, tag = 'smem constant byte address 0x4 - core index']
  #allocation1 [shape = 'u32[144,128]{1,0:T(1,128)}', space=vmem, size = 0x12000, scoped, tag = 'internal scratch']
  %s0 = inlined_call_operand.hbm [shape: f32[2,4,256], index: 0, kind: input, shape index: {}]
  %s1 = inlined_call_operand.vmem [shape: f32[2,4,1], index: 1, kind: output, shape index: {0}]
  %s2 = inlined_call_operand.vmem [shape: f32[2,4,1], index: 2, kind: output, shape index: {1}]
  %3 = xla_tuple %s1, %s2
  %s4 = sld [smem:[#allocation0]]
  $region49: #{tpu_custom_call.1} parent=0
    _
  %s6 = ssub.s32 1, %s4
  %s7 = scalar_select 0, %s6, %s4
  $region1: #{tpu_custom_call.1} parent=0
    #allocation2 [shape = 'u8[8192]{0}', space=vmem, size = 0x2000, scoped, tag = 'input window, operand 0']
    #allocation3 [shape = 's32[2]{0}', space=sflag, size = 0x8, scoped, tag = 'scoped memory for tpu_custom_call.1']
    %8 = vsyncpa [#allocation3], 0
    %s9 = scalar_lea.sflag [#allocation3], 1
    %10 = vsyncpa %s9, 0
    loop: start=0, step=1, limit=4
    $region2: #{tpu_custom_call.1} parent=1 // loop_pre_header
      _
    $region3: #{tpu_custom_call.1} parent=1 // loop_header
      %s12 = sphi 0, %s16
      %p13 = scmp.ge.s32.totalorder %s12, 4
      %s22 = sphi 0, %s24
      %s25 = sphi 0, %s22
      %s26 = sphi 0, %s25
      %s42 = sphi 0, %s26
      %s48 = sphi 0, %s50
      %s51 = sphi 0, %s48
      %s52 = sphi 0, %s51
      %s68 = sphi 0, %s52
      %s74 = sphi 0, %s76
      %s77 = sphi 0, %s74
      %s78 = sphi 0, %s77
      %s94 = sphi 0, %s78
    $region4: #{tpu_custom_call.1} parent=1 // loop_header_branch
      %15 = sbr.rel (%p13) target = $region8
    $region5: #{tpu_custom_call.1} parent=1 // loop_body
      %s17 = ssub.s32 %s12, 1
      %s18 = ssub.s32 %s12, 2
      %s19 = sadd.s32 %s12, 1
      %s20 = ssub.s32 %s12, %s19
      %p21 = scmp.eq.s32.totalorder %s20, 0
      %s23 = sadd.s32 %s22, 1
      %s24 = scalar_select %p21, %s22, %s23
      %p27 = pneg %p21
      %p28 = scmp.eq.s32.totalorder %s12, 1
      %p29 = por %p27, %p28
      %p30 = scmp.ne.s32.totalorder %s22, %s25
      %p31 = scmp.eq.s32.totalorder %s12, 0
      %p32 = por %p30, %p31
      %p33 = scmp.ne.s32.totalorder %s22, %s25
      %p34 = scmp.eq.s32.totalorder %s17, 1
      %p35 = por %p33, %p34
      %p36 = scmp.ne.s32.totalorder %s25, %s26
      %p37 = scmp.eq.s32.totalorder %s17, 0
      %p38 = por %p36, %p37
      %p39 = scmp.ne.s32.totalorder %s25, %s26
      %p40 = scmp.eq.s32.totalorder %s18, 1
      %p41 = por %p39, %p40
      %p43 = scmp.ne.s32.totalorder %s26, %s42
      %p44 = scmp.eq.s32.totalorder %s18, 0
      %p45 = por %p43, %p44
      %s46 = ssub.s32 %s12, %s19
      %p47 = scmp.eq.s32.totalorder %s46, 0
      %s49 = sadd.s32 %s48, 1
      %s50 = scalar_select %p47, %s48, %s49
      %p53 = pneg %p47
      %p54 = scmp.eq.s32.totalorder %s12, 1
      %p55 = por %p53, %p54
      %p56 = scmp.ne.s32.totalorder %s48, %s51
      %p57 = scmp.eq.s32.totalorder %s12, 0
      %p58 = por %p56, %p57
      %p59 = scmp.ne.s32.totalorder %s48, %s51
      %p60 = scmp.eq.s32.totalorder %s17, 1
      %p61 = por %p59, %p60
      %p62 = scmp.ne.s32.totalorder %s51, %s52
      %p63 = scmp.eq.s32.totalorder %s17, 0
      %p64 = por %p62, %p63
      %p65 = scmp.ne.s32.totalorder %s51, %s52
      %p66 = scmp.eq.s32.totalorder %s18, 1
      %p67 = por %p65, %p66
      %p69 = scmp.ne.s32.totalorder %s52, %s68
      %p70 = scmp.eq.s32.totalorder %s18, 0
      %p71 = por %p69, %p70
      %s72 = ssub.s32 %s12, %s19
      %p73 = scmp.eq.s32.totalorder %s72, 0
      %s75 = sadd.s32 %s74, 1
      %s76 = scalar_select %p73, %s74, %s75
      %p79 = pneg %p73
      %p80 = scmp.eq.s32.totalorder %s12, 1
      %p81 = por %p79, %p80
      %p82 = scmp.ne.s32.totalorder %s74, %s77
      %p83 = scmp.eq.s32.totalorder %s12, 0
      %p84 = por %p82, %p83
      %p85 = scmp.ne.s32.totalorder %s74, %s77
      %p86 = scmp.eq.s32.totalorder %s17, 1
      %p87 = por %p85, %p86
      %p88 = scmp.ne.s32.totalorder %s77, %s78
      %p89 = scmp.eq.s32.totalorder %s17, 0
      %p90 = por %p88, %p89
      %p91 = scmp.ne.s32.totalorder %s77, %s78
      %p92 = scmp.eq.s32.totalorder %s18, 1
      %p93 = por %p91, %p92
      %p95 = scmp.ne.s32.totalorder %s78, %s94
      %p96 = scmp.eq.s32.totalorder %s18, 0
      %p97 = por %p95, %p96
      %p98 = scmp.le.s32.totalorder 1, %s12
      %p99 = scmp.lt.s32.totalorder %s12, 3
      %p100 = pnand %p98, %p99
      %p101 = pneg %p100
      // Predicated region
      $region9: #{tpu_custom_call.1} parent=5 // pred_check
        _
      $region10: #{tpu_custom_call.1} parent=5 // pred_check_branch
        %103 = sbr.rel (%p100) target = $region12
      $region11: #{tpu_custom_call.1} parent=5 // pred_region
        %s104 = ssub.s32 %s12, 1
      $region12: #{tpu_custom_call.1} parent=5 // pred_fallthru
        _
      %p105 = scmp.lt.s32.totalorder %s12, 2
      // Predicated region
      $region13: #{tpu_custom_call.1} parent=5 // pred_check
        %p106 = pneg %p105
      $region14: #{tpu_custom_call.1} parent=5 // pred_check_branch
        %108 = sbr.rel (%p106) target = $region16
      $region15: #{tpu_custom_call.1} parent=5 // pred_region
        // Predicated region
        $region17: #{tpu_custom_call.1} parent=15 // pred_check
          %p109 = pneg %p32
        $region18: #{tpu_custom_call.1} parent=15 // pred_check_branch
          %111 = sbr.rel (%p109) target = $region20
        $region19: #{tpu_custom_call.1} parent=15 // pred_region
          %s112 = sand.u32 %s22, 1
          %s113 = scalar_lea.sflag [#allocation3], %s112
          %s114 = sand.u32 %s22, 1
          %s115 = smul.addr %s114, 8
          %s116 = scalar_lea.vmem [#allocation2], %s115
          %s118 = ssub.s32 128, 128
          %119 = vsyncadd %s113, %s118
          %s120 = smul.addr %s12, 2
          %s121 = smul.addr %s120, 64
          %s122 = scalar_lea.hbm %s0, %s121
          %s124 = sshll.u32 %s116, 4
          %s125 = int_to_ptr.vmem [resolvable:$true] %s124
          %127 = dma.hbm_to_vmem [thread:$0]  %s122, 128, %s125, %s113
        $region20: #{tpu_custom_call.1} parent=15 // pred_fallthru
          _
      $region16: #{tpu_custom_call.1} parent=5 // pred_fallthru
        _
      %p128 = scmp.le.s32.totalorder 1, %s12
      %p129 = scmp.lt.s32.totalorder %s12, 3
      %p130 = pnand %p128, %p129
      %p131 = pneg %p130
      // Predicated region
      $region21: #{tpu_custom_call.1} parent=5 // pred_check
        _
      $region22: #{tpu_custom_call.1} parent=5 // pred_check_branch
        %133 = sbr.rel (%p130) target = $region24
      $region23: #{tpu_custom_call.1} parent=5 // pred_region
        %s134 = ssub.s32 %s12, 1
        %s135 = sand.u32 %s25, 1
        %s136 = scalar_lea.sflag [#allocation3], %s135
        %s137 = sand.u32 %s25, 1
        %s138 = smul.addr %s137, 8
        %s139 = scalar_lea.vmem [#allocation2], %s138
        // Predicated region
        $region25: #{tpu_custom_call.1} parent=23 // pred_check
          %p140 = pneg %p38
        $region26: #{tpu_custom_call.1} parent=23 // pred_check_branch
          %142 = sbr.rel (%p140) target = $region28
        $region27: #{tpu_custom_call.1} parent=23 // pred_region
          %143 = dma.done %s136, 128
        $region28: #{tpu_custom_call.1} parent=23 // pred_fallthru
          _
        %s144 = sand.u32 %s25, 1
        %s145 = scalar_lea.sflag [#allocation3], %s144
        %s146 = sand.u32 %s25, 1
        %s147 = smul.addr %s146, 8
        %s148 = scalar_lea.vmem [#allocation2], %s147
        %p149 = pneg %p38
        %p150 = pneg %p35
        %p151 = pneg %p64
        %p152 = pneg %p61
        %p153 = scmp.lt.s32.totalorder %s17, 1
        %s154 = scalar_select %p153, %s17, 1
        %s155 = smul.addr %s154, 4
        %s156 = scalar_lea.vmem %s1, %s155
        %p157 = pneg %p90
        %p158 = pneg %p87
        %p159 = scmp.lt.s32.totalorder %s17, 1
        %s160 = scalar_select %p159, %s17, 1
        %s161 = smul.addr %s160, 4
        %s162 = scalar_lea.vmem %s2, %s161
        %p163 = scmp.lt.s32.totalorder %s17, 1
        %s164 = scalar_select %p163, %s17, 1
        %s165 = smul.addr %s164, 4
        %s166 = scalar_lea.vmem %s1, %s165
        %p167 = scmp.lt.s32.totalorder %s17, 1
        %s168 = scalar_select %p167, %s17, 1
        %s169 = smul.addr %s168, 4
        %s170 = scalar_lea.vmem %s2, %s169
        %v171 = vld [vmem:[%s139] sm:$0xff]
        %v173 = vcombine.high %v171, %v171
        %vm175 = vcmask 1043456
        %v176 = vsel %vm175, %v171, 0.0
        %v177 = vsel %vm175, %v173, 0.0
        %v178 = vadd.f32 %v176, %v177
        %179 = vadd.xlane.f32.xlu0 %v178
        %v180 = vpop.xlane.xlu0 %179
        %v181 = vmul.f32 %v180, 0.00390625
        %v184 = vunpack.c.l.s4 839922192
        %v185 = vunpack.c.0.s8 %v184
        %v186 = vlaneseq
        %v187 = vshrl.u32 %v186, 7
        %v188 = vsub.s32 %v185, %v187
        %v189 = vrot.slane %v181, %v188
        %v191 = vsub.f32 %v171, %v189
        %vm192 = vcmask 3072
        %193 = vst.msk [vmem:[%s166] sm:$0xf] %vm192, %v180
        %v194 = vmul.f32 %v191, %v191
        %v196 = vcombine.high %v194, %v194
        %v198 = vsel %vm175, %v194, 0.0
        %v199 = vsel %vm175, %v196, 0.0
        %v200 = vadd.f32 %v198, %v199
        %201 = vadd.xlane.f32.xlu0 %v200
        %v202 = vpop.xlane.xlu0 %201
        %203 = vst.msk [vmem:[%s170] sm:$0xf] %vm192, %v202
        %p204 = scmp.lt.s32.totalorder %s17, 1
        %s205 = scalar_select %p204, %s17, 1
        %s206 = smul.addr %s205, 4
        %s207 = scalar_lea.vmem %s1, %s206
        %p208 = scmp.lt.s32.totalorder %s17, 1
        %s209 = scalar_select %p208, %s17, 1
        %s210 = smul.addr %s209, 4
        %s211 = scalar_lea.vmem %s2, %s210
        // Predicated region
        $region29: #{tpu_custom_call.1} parent=23 // pred_check
          %p212 = pneg %p61
        $region30: #{tpu_custom_call.1} parent=23 // pred_check_branch
          %214 = sbr.rel (%p212) target = $region32
        $region31: #{tpu_custom_call.1} parent=23 // pred_region
          _
        $region32: #{tpu_custom_call.1} parent=23 // pred_fallthru
          _
        // Predicated region
        $region33: #{tpu_custom_call.1} parent=23 // pred_check
          %p215 = pneg %p87
        $region34: #{tpu_custom_call.1} parent=23 // pred_check_branch
          %217 = sbr.rel (%p215) target = $region36
        $region35: #{tpu_custom_call.1} parent=23 // pred_region
          _
        $region36: #{tpu_custom_call.1} parent=23 // pred_fallthru
          _
      $region24: #{tpu_custom_call.1} parent=5 // pred_fallthru
        _
      %p218 = scmp.le.s32.totalorder 2, %s12
      // Predicated region
      $region37: #{tpu_custom_call.1} parent=5 // pred_check
        %p219 = pneg %p218
      $region38: #{tpu_custom_call.1} parent=5 // pred_check_branch
        %221 = sbr.rel (%p219) target = $region40
      $region39: #{tpu_custom_call.1} parent=5 // pred_region
        %s222 = ssub.s32 %s12, 2
        // Predicated region
        $region41: #{tpu_custom_call.1} parent=39 // pred_check
          %p223 = pneg %p67
        $region42: #{tpu_custom_call.1} parent=39 // pred_check_branch
          %225 = sbr.rel (%p223) target = $region44
        $region43: #{tpu_custom_call.1} parent=39 // pred_region
          %p226 = scmp.lt.s32.totalorder %s18, 1
          %s227 = scalar_select %p226, %s18, 1
          %s228 = smul.addr %s227, 4
          %s229 = scalar_lea.vmem %s1, %s228
        $region44: #{tpu_custom_call.1} parent=39 // pred_fallthru
          _
        // Predicated region
        $region45: #{tpu_custom_call.1} parent=39 // pred_check
          %p230 = pneg %p93
        $region46: #{tpu_custom_call.1} parent=39 // pred_check_branch
          %232 = sbr.rel (%p230) target = $region48
        $region47: #{tpu_custom_call.1} parent=39 // pred_region
          %p233 = scmp.lt.s32.totalorder %s18, 1
          %s234 = scalar_select %p233, %s18, 1
          %s235 = smul.addr %s234, 4
          %s236 = scalar_lea.vmem %s2, %s235
        $region48: #{tpu_custom_call.1} parent=39 // pred_fallthru
          _
      $region40: #{tpu_custom_call.1} parent=5 // pred_fallthru
        _
    $region6: #{tpu_custom_call.1} parent=1 // loop_footer
      %s16 = sadd.s32 1, %s12
    $region7: #{tpu_custom_call.1} parent=1 // loop_footer_branch
      %11 = sbr.rel target = $region3
    $region8: #{tpu_custom_call.1} parent=1 // loop_exit
      _
    %237 = vsyncpa [#allocation3], 1
    %s238 = scalar_lea.sflag [#allocation3], 1
    %239 = vsyncpa %s238, 1

</llo_original>
